<compile_context>
chip_gen: v6e
topology: v6e:2x2x1
jax: 0.10.0
libtpu: 0.0.40
codegen_flags: <defaults>
</compile_context>

<pallas_src>
import jax
import jax.numpy as jnp
from jax.experimental import pallas as pl
from jax.experimental.pallas import tpu as pltpu


_LANE = 128


def _mlr_kernel(params_ref, xT_ref, o_ref):
    # params_ref: SMEM (4,) f32  -> [w0, w1, w2, b]
    # xT_ref:     VMEM (3, TB)   -> feature-major input tile (batch on lanes)
    # o_ref:      VMEM (1, TB)   -> lane-dense output tile
    w0 = params_ref[0]
    w1 = params_ref[1]
    w2 = params_ref[2]
    b = params_ref[3]

    x0 = xT_ref[0:1, :]
    x1 = xT_ref[1:2, :]
    x2 = xT_ref[2:3, :]

    # Pure VPU FMAs with scalar-broadcast weights; exactly nn.Linear math.
    o_ref[...] = (w0 * x0 + w1 * x1 + w2 * x2 + b).astype(o_ref.dtype)


def _choose_tile(batch, tb_max):
    """Lane-multiple batch tile.

    As large as possible (amortize the ~0.35 us / ~600-cycle grid-step
    overhead) but small enough that the grid has >= 4 tiles so v7x's two
    TensorCores can load-balance the "parallel" batch axis.
    """
    b_lanes = pl.cdiv(batch, _LANE) * _LANE
    tb = max(_LANE, min(tb_max, pl.cdiv(b_lanes, 4)))
    tb = pl.cdiv(tb, _LANE) * _LANE
    return tb


def mlr_forward_feature_major(xT, weight, bias, *, tb_max=131072):
    """Fast path: xT is the feature-major (3, B) view of the input.

    Zero-copy layout: the kernel DMAs (3, TB) lane-dense tiles directly; the
    only HBM traffic is the input read + the (B,) output write.
    """
    in_features, batch = xT.shape
    out_features = weight.shape[0]
    assert in_features == 3 and out_features == 1

    # 4 scalars (3 weights + bias) packed for SMEM.
    params = jnp.concatenate(
        [weight.reshape(-1), bias.reshape(-1)]
    ).astype(xT.dtype)  # (4,)

    tb = _choose_tile(batch, tb_max)
    grid = (pl.cdiv(batch, tb),)  # ragged last tile is edge-masked: no jnp.pad

    out = pl.pallas_call(
        _mlr_kernel,
        out_shape=jax.ShapeDtypeStruct((1, batch), xT.dtype),
        grid=grid,
        in_specs=[
            # Tiny parameter vector lives in SMEM (no VMEM tile, no per-step DMA).
            pl.BlockSpec(memory_space=pltpu.MemorySpace.SMEM),
            # (3, TB) input tile: sublane dim equals the full feature dim (3),
            # lane dim is a multiple of 128 -> legal and lane-dense.
            pl.BlockSpec((in_features, tb), lambda i: (0, i)),
        ],
        # Lane-dense (1, TB) output tile -> unmasked full-lane stores except at
        # the ragged edge.
        out_specs=pl.BlockSpec((1, tb), lambda i: (0, i)),
        compiler_params=pltpu.CompilerParams(
            dimension_semantics=("parallel",),
            # v5e's scoped-VMEM default is only 16 MiB; raise it so the large
            # batch tiles (~16 MiB double-buffered at TB=131072) fit on every
            # generation while staying under v7x's 64 MiB physical VMEM.
            vmem_limit_bytes=40 << 20,
        ),
    )(params, xT)

    # Back to nn.Linear's (B, out_features) shape (free, contiguous reshape).
    return out.reshape(batch, out_features)


def mlr_forward(x, weight, bias, *, tb_max=131072):
    """nn.Linear(3, 1)-compatible entry point: x is row-major (B, 3)."""
    # TODO(synk): this row-major -> feature-major relayout is its own HBM-bound
    # XLA pass (~2.5x total traffic); fuse the transpose into the producer of x
    # and call mlr_forward_feature_major directly for peak bandwidth.
    return mlr_forward_feature_major(x.T, weight, bias, tb_max=tb_max)


if __name__ == "__main__":
    key = jax.random.PRNGKey(0)
    kx, kw, kb = jax.random.split(key, 3)

    B, IN, OUT = 8, 3, 1  # small shapes consistent with nn.Linear(3, 1)

    # Deterministic parameter init (mirrors torch's U(-1/sqrt(in), 1/sqrt(in)))
    bound = 1.0 / jnp.sqrt(float(IN))
    weight = jax.random.uniform(kw, (OUT, IN), jnp.float32, -bound, bound)
    bias = jax.random.uniform(kb, (OUT,), jnp.float32, -bound, bound)

    # Producer emits the input directly in the feature-major (3, B) layout the
    # kernel wants (perf feedback: fuse the transpose into the producer).
    xT = jax.random.normal(kx, (IN, B), jnp.float32)  # feature-major view
    x = xT.T                                          # row-major nn.Linear view

    # Reference: same math as torch.nn.Linear.
    y_ref = x @ weight.T + bias

    # Fast path: no relayout anywhere.
    y_fast = mlr_forward_feature_major(xT, weight, bias)
    jax.block_until_ready(y_fast)
    assert y_fast.shape == (B, OUT)
    assert jnp.allclose(y_fast, y_ref, atol=1e-5, rtol=1e-5)

    # Row-major, nn.Linear-identical API path.
    y_rm = mlr_forward(x, weight, bias)
    jax.block_until_ready(y_rm)
    assert y_rm.shape == (B, OUT)
    assert jnp.allclose(y_rm, y_ref, atol=1e-5, rtol=1e-5)

    print("KERNEL_OK")
</pallas_src>

<mosaic_0001>
module attributes {stable_mosaic.version = 11 : i64} {
  func.func @_mlr_kernel(%arg0: i32, %arg1: memref<4xf32, #tpu.memory_space<smem>>, %arg2: memref<3x128xf32, #tpu.memory_space<vmem>>, %arg3: memref<1x128xf32, #tpu.memory_space<vmem>>) attributes {dimension_semantics = [#tpu.dimension_semantics<parallel>], iteration_bounds = array<i64: 1>, scalar_prefetch = 0 : i64, scratch_operands = 0 : i64, tpu.core_type = #tpu.core_type<tc>, window_params = [{transform_indices = @transform_0, window_bounds = array<i64: 4>}, {transform_indices = @transform_1, window_bounds = array<i64: 3, 128>}, {transform_indices = @transform_2, window_bounds = array<i64: 1, 128>}]} {
    %c0 = arith.constant 0 : index
    %0 = memref.load %arg1[%c0] : memref<4xf32, #tpu.memory_space<smem>>
    %c1 = arith.constant 1 : index
    %1 = memref.load %arg1[%c1] : memref<4xf32, #tpu.memory_space<smem>>
    %c2 = arith.constant 2 : index
    %2 = memref.load %arg1[%c2] : memref<4xf32, #tpu.memory_space<smem>>
    %c3 = arith.constant 3 : index
    %3 = memref.load %arg1[%c3] : memref<4xf32, #tpu.memory_space<smem>>
    %c0_0 = arith.constant 0 : index
    %c0_1 = arith.constant 0 : index
    %4 = vector.load %arg2[%c0_0, %c0_1] : memref<3x128xf32, #tpu.memory_space<vmem>>, vector<1x128xf32>
    %c1_2 = arith.constant 1 : index
    %c0_3 = arith.constant 0 : index
    %5 = vector.load %arg2[%c1_2, %c0_3] : memref<3x128xf32, #tpu.memory_space<vmem>>, vector<1x128xf32>
    %c2_4 = arith.constant 2 : index
    %c0_5 = arith.constant 0 : index
    %6 = vector.load %arg2[%c2_4, %c0_5] : memref<3x128xf32, #tpu.memory_space<vmem>>, vector<1x128xf32>
    %7 = vector.broadcast %0 : f32 to vector<1x128xf32>
    %8 = arith.mulf %7, %4 : vector<1x128xf32>
    %9 = vector.broadcast %1 : f32 to vector<1x128xf32>
    %10 = arith.mulf %9, %5 : vector<1x128xf32>
    %11 = arith.addf %8, %10 : vector<1x128xf32>
    %12 = vector.broadcast %2 : f32 to vector<1x128xf32>
    %13 = arith.mulf %12, %6 : vector<1x128xf32>
    %14 = arith.addf %11, %13 : vector<1x128xf32>
    %15 = vector.broadcast %3 : f32 to vector<1x128xf32>
    %16 = arith.addf %14, %15 : vector<1x128xf32>
    %c0_6 = arith.constant 0 : index
    %c0_7 = arith.constant 0 : index
    %17 = vector.load %arg3[%c0_6, %c0_7] : memref<1x128xf32, #tpu.memory_space<vmem>>, vector<1x128xf32>
    tpu.vector_store %arg3[%c0_6, %c0_7], %16 {strides = array<i32>} : memref<1x128xf32, #tpu.memory_space<vmem>>, vector<1x128xf32>,
    return
  }
  func.func @transform_0(%arg0: i32) -> i32 {
    %c0_i32 = arith.constant 0 : i32
    %c0_i32_0 = arith.constant 0 : i32
    return %c0_i32 : i32
  }
  func.func @transform_1(%arg0: i32) -> (i32, i32) {
    %c0_i32 = arith.constant 0 : i32
    %c0_i32_0 = arith.constant 0 : i32
    return %c0_i32, %arg0 : i32, i32
  }
  func.func @transform_2(%arg0: i32) -> (i32, i32) {
    %c0_i32 = arith.constant 0 : i32
    %c0_i32_0 = arith.constant 0 : i32
    return %c0_i32, %arg0 : i32, i32
  }
}

</mosaic_0001>

<llo_original>
// kernel: tpu_custom_call.1
$region0: #{tpu_custom_call.1}
  #allocation0 [shape = 'u32[]', space=smem, size = 0x4, offset = 0x4, fixed_abs, tag = 'smem constant byte address 0x4 - core index']
  #allocation1 [shape = 'u32[144,128]{1,0:T(1,128)}', space=vmem, size = 0x12000, scoped, tag = 'internal scratch']
  %s0 = inlined_call_operand.hbm [shape: f32[4], index: 0, kind: input, shape index: {}]
  %s1 = inlined_call_operand.hbm [shape: f32[3,8], index: 1, kind: input, shape index: {}]
  %s2 = inlined_call_operand.hbm [shape: f32[1,8], index: 2, kind: output, shape index: {}]
  %s3 = sld [smem:[#allocation0]]
  $region26: #{tpu_custom_call.1} parent=0
    _
  %s5 = ssub.s32 1, %s3
  %s6 = scalar_select 0, %s5, %s3
  $region1: #{tpu_custom_call.1} parent=0
    #allocation2 [shape = 'u8[512]{0}', space=smem, size = 0x200, scoped, tag = 'input window, operand 0, single buffered']
    #allocation3 [shape = 's32[1]{0}', space=sflag, size = 0x4, scoped, tag = 'scoped memory for tpu_custom_call.1']
    #allocation4 [shape = 's32[1]{0}', space=sflag, size = 0x4, scoped, tag = 'scoped memory for tpu_custom_call.1']
    #allocation5 [shape = 's32[1]{0}', space=sflag, size = 0x4, scoped, tag = 'scoped memory for tpu_custom_call.1']
    #allocation6 [shape = 'u8[2048]{0}', space=vmem, size = 0x800, scoped, tag = 'input window, operand 1, single buffered']
    #allocation7 [shape = 'u8[512]{0}', space=vmem, size = 0x400, scoped, tag = 'output window, operand 0, single buffered']
    %7 = vsyncpa [#allocation5], 0
    %8 = vsyncpa [#allocation3], 0
    %9 = vsyncpa [#allocation4], 0
    // Predicated region
    $region2: #{tpu_custom_call.1} parent=1 // pred_check
      _
    $region3: #{tpu_custom_call.1} parent=1 // pred_check_branch
      %11 = sbr.rel (0) target = $region5
    $region4: #{tpu_custom_call.1} parent=1 // pred_region
      %s13 = ssub.s32 16, 16
      %14 = vsyncadd [#allocation5], %s13
      %17 = dma.hbm_to_smem %s0, 16, [#allocation2], [#allocation5]
    $region5: #{tpu_custom_call.1} parent=1 // pred_fallthru
      _
    // Predicated region
    $region6: #{tpu_custom_call.1} parent=1 // pred_check
      _
    $region7: #{tpu_custom_call.1} parent=1 // pred_check_branch
      %19 = sbr.rel (0) target = $region9
    $region8: #{tpu_custom_call.1} parent=1 // pred_region
      %s21 = ssub.s32 64, 64
      %22 = vsyncadd [#allocation3], %s21
      %s24 = sshll.u32 [#allocation6], 4
      %s25 = int_to_ptr.vmem [resolvable:$true] %s24
      %27 = dma.hbm_to_vmem [thread:$0]  %s1, 64, %s25, [#allocation3]
    $region9: #{tpu_custom_call.1} parent=1 // pred_fallthru
      _
    // Predicated region
    $region10: #{tpu_custom_call.1} parent=1 // pred_check
      _
    $region11: #{tpu_custom_call.1} parent=1 // pred_check_branch
      %29 = sbr.rel (0) target = $region13
    $region12: #{tpu_custom_call.1} parent=1 // pred_region
      %30 = dma.done [#allocation5], 16
    $region13: #{tpu_custom_call.1} parent=1 // pred_fallthru
      _
    // Predicated region
    $region14: #{tpu_custom_call.1} parent=1 // pred_check
      _
    $region15: #{tpu_custom_call.1} parent=1 // pred_check_branch
      %32 = sbr.rel (0) target = $region17
    $region16: #{tpu_custom_call.1} parent=1 // pred_region
      %33 = dma.done [#allocation3], 64
    $region17: #{tpu_custom_call.1} parent=1 // pred_fallthru
      _
    %34 = sfence
    %s35 = sld [smem:[#allocation2]]
    %s36 = sld [smem:[#allocation2 + $0x1]]
    %s37 = sld [smem:[#allocation2 + $0x2]]
    %s38 = sld [smem:[#allocation2 + $0x3]]
    %v39 = vld [vmem:[#allocation6] sm:$0x1]
    %v40 = vld [vmem:[#allocation6 + $0x1] sm:$0x1]
    %v41 = vld [vmem:[#allocation6 + $0x2] sm:$0x1]
    %v42 = vstv %s35
    %v43 = vmul.f32 %v42, %v39
    %v44 = vstv %s36
    %v45 = vmul.f32 %v44, %v40
    %v46 = vadd.f32 %v43, %v45
    %v47 = vstv %s37
    %v48 = vmul.f32 %v47, %v41
    %v49 = vadd.f32 %v46, %v48
    %v50 = vstv %s38
    %v51 = vadd.f32 %v49, %v50
    %52 = vst [vmem:[#allocation7] sm:$0x1] %v51
    // Predicated region
    $region18: #{tpu_custom_call.1} parent=1 // pred_check
      _
    $region19: #{tpu_custom_call.1} parent=1 // pred_check_branch
      %54 = sbr.rel (0) target = $region21
    $region20: #{tpu_custom_call.1} parent=1 // pred_region
      %s56 = ssub.s32 16, 16
      %57 = vsyncadd [#allocation4], %s56
      %s59 = sshll.u32 [#allocation7], 4
      %s60 = int_to_ptr.vmem [resolvable:$true] %s59
      %62 = dma.vmem_to_hbm [thread:$0]  %s60, 16, %s2, [#allocation4]
    $region21: #{tpu_custom_call.1} parent=1 // pred_fallthru
      _
    // Predicated region
    $region22: #{tpu_custom_call.1} parent=1 // pred_check
      _
    $region23: #{tpu_custom_call.1} parent=1 // pred_check_branch
      %64 = sbr.rel (0) target = $region25
    $region24: #{tpu_custom_call.1} parent=1 // pred_region
      %65 = dma.done [#allocation4], 16
    $region25: #{tpu_custom_call.1} parent=1 // pred_fallthru
      _
    %66 = vsyncpa [#allocation3], 1
    %67 = vsyncpa [#allocation4], 1
    %68 = vsyncpa [#allocation5], 1

</llo_original>
